<compile_context>
chip_gen: v5e
topology: v5e:2x2
jax: 0.10.0
libtpu: 0.0.40
codegen_flags: <defaults>
</compile_context>

<pallas_src>
import jax
import jax.numpy as jnp
from jax import lax
from jax.experimental import pallas as pl
from jax.experimental.pallas import tpu as pltpu


def _round_up(x, m):
    return ((x + m - 1) // m) * m


def _maybe_pad(a, target_shape):
    pads = [(0, t - s) for s, t in zip(a.shape, target_shape)]
    if any(hi for _, hi in pads):
        a = jnp.pad(a, pads)
    return a


def _lora_linear_kernel(x_ref, w_ref, bias_ref, u_ref, at_ref, o_ref, acc_ref):
    # x_ref   : (tm, tk)        input tile                    (compute dtype)
    # w_ref   : (tn, tk)        weight tile, native [N, K]    (compute dtype)
    # bias_ref: (1, tn)         bias tile                     (f32)
    # u_ref   : (tm, rank_p)    precomputed x @ lora_b.T      (f32)
    # at_ref  : (rank_p, tn)    scale * lora_a.T              (f32)
    # o_ref   : (tm, tn)        output tile
    # acc_ref : (tm, tn) f32    accumulator (VMEM scratch), carries the bias
    k = pl.program_id(2)

    @pl.when(k == 0)
    def _init():
        # Fold bias into the accumulator init (removes an epilogue VPU add).
        acc_ref[...] = jnp.broadcast_to(bias_ref[...], acc_ref.shape)

    # x @ W.T with W kept in its native [N, K] layout: contract dim 1 x dim 1.
    acc_ref[...] += lax.dot_general(
        x_ref[...], w_ref[...],
        dimension_numbers=(((1,), (1,)), ((), ())),
        preferred_element_type=jnp.float32)

    @pl.when(k == pl.num_programs(2) - 1)
    def _finalize():
        # Rank-space up-projection, done once per output tile. Padded rank
        # rows of u / at are zero so the padding contributes nothing.
        lora = jnp.dot(u_ref[...], at_ref[...],
                       preferred_element_type=jnp.float32)
        o_ref[...] = (acc_ref[...] + lora).astype(o_ref.dtype)


def _pick_vmem_limit(footprint_bytes):
    """VMEM budget: generous headroom, tighter cap on v7x (64 MiB physical)."""
    cap = 100 * 1024 * 1024
    try:
        kind = jax.devices()[0].device_kind.lower()
        if "v7" in kind:
            cap = 56 * 1024 * 1024
    except Exception:
        cap = 56 * 1024 * 1024
    return int(min(max(2 * footprint_bytes, 32 * 1024 * 1024), cap))


def lora_linear(x, weight, bias, lora_a, lora_b, scale, *,
                tm=512, tn=512, tk=1024, compute_dtype=None):
    """Pallas forward of LinearRoLALayer (rank > 0, dropout == nn.Identity).

    x:       [M, in_features]
    weight:  [out_features, in_features]   (frozen nn.Linear weight, native layout)
    bias:    [out_features]
    lora_a:  [out_features, rank]
    lora_b:  [rank, in_features]
    compute_dtype: dtype for the big matmul operands (x, W). Defaults to
      x.dtype (exact module semantics); pass jnp.bfloat16 to halve HBM / VMEM
      traffic and hit the fast MXU path (f32 accumulation is always kept).
    """
    M, K = x.shape
    N = weight.shape[0]
    rank = lora_a.shape[1]
    out_dtype = x.dtype
    compute_dtype = compute_dtype or x.dtype

    # ---- tile selection (keep (8, 128) alignment, clamp to problem size) ----
    tm = max(8, min(tm, _round_up(M, 8)))
    tn = max(128, min(tn, _round_up(N, 128)))
    tk = max(128, min(tk, _round_up(K, 128)))
    # v7x has 2 TensorCores: if all of M fits in one tile, expose parallelism
    # along N instead so both cores get work.
    if _round_up(M, tm) // tm == 1:
        while tn > 128 and _round_up(N, tn) // tn < 2:
            tn //= 2

    M_p = _round_up(M, tm)
    N_p = _round_up(N, tn)
    K_p = _round_up(K, tk)
    rank_p = _round_up(max(rank, 1), 128)   # lane-pad rank (zeros -> no effect)

    # ---- wrapper-side prep (no weight transpose; tiny LoRA matmul hoisted) ----
    x_p = _maybe_pad(x, (M_p, K_p)).astype(compute_dtype)
    w_p = _maybe_pad(weight, (N_p, K_p)).astype(compute_dtype)      # native [N, K]
    bias_p = _maybe_pad(bias.astype(jnp.float32).reshape(1, N), (1, N_p))
    # LoRA down-projection: [M, K] x [K, rank] — negligible FLOPs, done once.
    u = jnp.dot(x, lora_b.T, preferred_element_type=jnp.float32)    # [M, rank]
    u_p = _maybe_pad(u.astype(jnp.float32), (M_p, rank_p))
    at_p = _maybe_pad(jnp.float32(scale) * lora_a.T.astype(jnp.float32),
                      (rank_p, N_p))                                 # [rank_p, N_p]

    grid = (M_p // tm, N_p // tn, K_p // tk)

    itemsize = jnp.dtype(compute_dtype).itemsize
    footprint = (2 * (tm * tk + tn * tk) * itemsize            # x, W double-buffered
                 + 2 * (tn + tm * rank_p + rank_p * tn) * 4    # bias, u, scale*A.T
                 + 2 * tm * tn * jnp.dtype(out_dtype).itemsize  # output
                 + tm * tn * 4)                                 # f32 accumulator

    cost = pl.CostEstimate(
        flops=2 * M_p * N_p * K_p + 2 * M_p * rank_p * N_p,
        transcendentals=0,
        bytes_accessed=(x_p.size * itemsize * (N_p // tn)
                        + w_p.size * itemsize * (M_p // tm)
                        + u_p.size * 4 + at_p.size * 4 + bias_p.size * 4
                        + M_p * N_p * jnp.dtype(out_dtype).itemsize),
    )

    out_p = pl.pallas_call(
        _lora_linear_kernel,
        out_shape=jax.ShapeDtypeStruct((M_p, N_p), out_dtype),
        grid_spec=pltpu.PrefetchScalarGridSpec(
            num_scalar_prefetch=0,
            grid=grid,
            in_specs=[
                pl.BlockSpec((tm, tk), lambda i, j, k: (i, k)),        # x
                pl.BlockSpec((tn, tk), lambda i, j, k: (j, k)),        # W (native [N,K])
                pl.BlockSpec((1, tn), lambda i, j, k: (0, j)),         # bias
                pl.BlockSpec((tm, rank_p), lambda i, j, k: (i, 0)),    # u = x @ B.T
                pl.BlockSpec((rank_p, tn), lambda i, j, k: (0, j)),    # scale * A.T
            ],
            out_specs=pl.BlockSpec((tm, tn), lambda i, j, k: (i, j)),
            scratch_shapes=[pltpu.VMEM((tm, tn), jnp.float32)],        # accumulator
        ),
        compiler_params=pltpu.CompilerParams(
            dimension_semantics=("parallel", "parallel", "arbitrary"),
            vmem_limit_bytes=_pick_vmem_limit(footprint),
        ),
        cost_estimate=cost,
    )(x_p, w_p, bias_p, u_p, at_p)

    return out_p[:M, :N]


def lora_linear_ref(x, weight, bias, lora_a, lora_b, scale):
    """Pure-JAX reference matching the PyTorch forward (dropout == Identity)."""
    out1 = x @ weight.T + bias
    out2 = scale * (x @ (lora_a @ lora_b).T)
    return out1 + out2


if __name__ == "__main__":
    # Small module hyperparameters consistent with the forward pass.
    in_features = 32
    out_features = 32
    rank = 4
    lora_alpha = 8.0
    dropout_rate = 0.0          # -> nn.Identity, exact match to the kernel
    scale = lora_alpha / rank

    M = 16                      # number of input rows (e.g. batch * seq)

    key = jax.random.PRNGKey(0)
    kx, kw, kb, ka, kbb = jax.random.split(key, 5)

    x = jax.random.normal(kx, (M, in_features), dtype=jnp.float32)
    weight = jax.random.normal(kw, (out_features, in_features), dtype=jnp.float32) * 0.1
    bias = jax.random.normal(kb, (out_features,), dtype=jnp.float32) * 0.1
    # lora_a: kaiming-uniform-ish deterministic init; lora_b is zeros in the
    # module's __init__, randomized here so the low-rank path is exercised.
    lora_a = jax.random.uniform(ka, (out_features, rank), dtype=jnp.float32,
                                minval=-0.5, maxval=0.5)
    lora_b = jax.random.normal(kbb, (rank, in_features), dtype=jnp.float32) * 0.1

    # TODO(synk): training-mode dropout (dropout_rate > 0) would need the
    # in-kernel pltpu PRNG; with dropout_rate == 0 the module uses nn.Identity,
    # which is what this kernel implements.

    ref = lora_linear_ref(x, weight, bias, lora_a, lora_b, scale)

    # Exact-dtype path (f32 end-to-end, matches the PyTorch module numerics).
    out = jax.block_until_ready(
        lora_linear(x, weight, bias, lora_a, lora_b, scale))
    assert out.shape == (M, out_features)
    assert jnp.allclose(out, ref, atol=1e-4, rtol=1e-4), (
        f"f32 max abs err = {jnp.max(jnp.abs(out - ref))}")

    # Fast path: bf16 matmul operands, f32 accumulation (perf recommendation).
    out_bf16 = jax.block_until_ready(
        lora_linear(x, weight, bias, lora_a, lora_b, scale,
                    compute_dtype=jnp.bfloat16))
    assert jnp.allclose(out_bf16, ref, atol=5e-2, rtol=5e-2), (
        f"bf16 max abs err = {jnp.max(jnp.abs(out_bf16 - ref))}")

    print("KERNEL_OK")
</pallas_src>

<mosaic_0001>
module attributes {stable_mosaic.version = 11 : i64} {
  func.func @_lora_linear_kernel(%arg0: i32, %arg1: i32, %arg2: i32, %arg3: memref<16x128xf32, #tpu.memory_space<vmem>>, %arg4: memref<128x128xf32, #tpu.memory_space<vmem>>, %arg5: memref<1x128xf32, #tpu.memory_space<vmem>>, %arg6: memref<16x128xf32, #tpu.memory_space<vmem>>, %arg7: memref<128x128xf32, #tpu.memory_space<vmem>>, %arg8: memref<16x128xf32, #tpu.memory_space<vmem>>, %arg9: memref<16x128xf32, #tpu.memory_space<vmem>>) attributes {dimension_semantics = [#tpu.dimension_semantics<parallel>, #tpu.dimension_semantics<parallel>, #tpu.dimension_semantics<arbitrary>], iteration_bounds = array<i64: 1, 1, 1>, scalar_prefetch = 0 : i64, scratch_operands = 1 : i64, tpu.core_type = #tpu.core_type<tc>, window_params = [{transform_indices = @transform_0, window_bounds = array<i64: 16, 128>}, {transform_indices = @transform_1, window_bounds = array<i64: 128, 128>}, {transform_indices = @transform_2, window_bounds = array<i64: 1, 128>}, {transform_indices = @transform_3, window_bounds = array<i64: 16, 128>}, {transform_indices = @transform_4, window_bounds = array<i64: 128, 128>}, {transform_indices = @transform_5, window_bounds = array<i64: 16, 128>}]} {
    %c0_i32 = arith.constant 0 : i32
    %0 = arith.cmpi eq, %arg2, %c0_i32 : i32
    %1 = arith.extui %0 : i1 to i32
    %c0_i32_0 = arith.constant 0 : i32
    %2 = arith.cmpi ne, %1, %c0_i32_0 : i32
    scf.if %2 {
      %c0_10 = arith.constant 0 : index
      %c0_11 = arith.constant 0 : index
      %12 = vector.load %arg5[%c0_10, %c0_11] : memref<1x128xf32, #tpu.memory_space<vmem>>, vector<1x128xf32>
      %13 = vector.shape_cast %12 : vector<1x128xf32> to vector<1x128xf32>
      %14 = vector.broadcast %13 : vector<1x128xf32> to vector<16x128xf32>
      %c0_12 = arith.constant 0 : index
      %c0_13 = arith.constant 0 : index
      %15 = vector.load %arg9[%c0_12, %c0_13] : memref<16x128xf32, #tpu.memory_space<vmem>>, vector<16x128xf32>
      tpu.vector_store %arg9[%c0_12, %c0_13], %14 {strides = array<i32>} : memref<16x128xf32, #tpu.memory_space<vmem>>, vector<16x128xf32>,
    } else {
    }
    %c0 = arith.constant 0 : index
    %c0_1 = arith.constant 0 : index
    %3 = vector.load %arg9[%c0, %c0_1] : memref<16x128xf32, #tpu.memory_space<vmem>>, vector<16x128xf32>
    %c0_2 = arith.constant 0 : index
    %c0_3 = arith.constant 0 : index
    %4 = vector.load %arg3[%c0_2, %c0_3] : memref<16x128xf32, #tpu.memory_space<vmem>>, vector<16x128xf32>
    %c0_4 = arith.constant 0 : index
    %c0_5 = arith.constant 0 : index
    %5 = vector.load %arg4[%c0_4, %c0_5] : memref<128x128xf32, #tpu.memory_space<vmem>>, vector<128x128xf32>
    %cst = arith.constant dense<0.000000e+00> : vector<16x128xf32>
    %6 = tpu.matmul %4, %5, %cst {dimension_numbers = #tpu.dot_dimension_numbers<[1], [1], [0], [0], [0, 0, 1, 0], [], []>} : vector<16x128xf32>, vector<128x128xf32>, vector<16x128xf32> -> vector<16x128xf32>
    %7 = arith.addf %3, %6 : vector<16x128xf32>
    %c0_6 = arith.constant 0 : index
    %c0_7 = arith.constant 0 : index
    %8 = vector.load %arg9[%c0_6, %c0_7] : memref<16x128xf32, #tpu.memory_space<vmem>>, vector<16x128xf32>
    tpu.vector_store %arg9[%c0_6, %c0_7], %7 {strides = array<i32>} : memref<16x128xf32, #tpu.memory_space<vmem>>, vector<16x128xf32>,
    %c0_i32_8 = arith.constant 0 : i32
    %9 = arith.cmpi eq, %arg2, %c0_i32_8 : i32
    %10 = arith.extui %9 : i1 to i32
    %c0_i32_9 = arith.constant 0 : i32
    %11 = arith.cmpi ne, %10, %c0_i32_9 : i32
    scf.if %11 {
      %c0_10 = arith.constant 0 : index
      %c0_11 = arith.constant 0 : index
      %12 = vector.load %arg6[%c0_10, %c0_11] : memref<16x128xf32, #tpu.memory_space<vmem>>, vector<16x128xf32>
      %c0_12 = arith.constant 0 : index
      %c0_13 = arith.constant 0 : index
      %13 = vector.load %arg7[%c0_12, %c0_13] : memref<128x128xf32, #tpu.memory_space<vmem>>, vector<128x128xf32>
      %cst_14 = arith.constant dense<0.000000e+00> : vector<16x128xf32>
      %14 = tpu.matmul %12, %13, %cst_14 {dimension_numbers = #tpu.dot_dimension_numbers<[1], [0], [0], [1], [0, 0, 1, 1], [], []>} : vector<16x128xf32>, vector<128x128xf32>, vector<16x128xf32> -> vector<16x128xf32>
      %c0_15 = arith.constant 0 : index
      %c0_16 = arith.constant 0 : index
      %15 = vector.load %arg9[%c0_15, %c0_16] : memref<16x128xf32, #tpu.memory_space<vmem>>, vector<16x128xf32>
      %16 = arith.addf %15, %14 : vector<16x128xf32>
      %c0_17 = arith.constant 0 : index
      %c0_18 = arith.constant 0 : index
      %17 = vector.load %arg8[%c0_17, %c0_18] : memref<16x128xf32, #tpu.memory_space<vmem>>, vector<16x128xf32>
      tpu.vector_store %arg8[%c0_17, %c0_18], %16 {strides = array<i32>} : memref<16x128xf32, #tpu.memory_space<vmem>>, vector<16x128xf32>,
    } else {
    }
    return
  }
  func.func @transform_0(%arg0: i32, %arg1: i32, %arg2: i32) -> (i32, i32) {
    %c0_i32 = arith.constant 0 : i32
    return %arg0, %arg2 : i32, i32
  }
  func.func @transform_1(%arg0: i32, %arg1: i32, %arg2: i32) -> (i32, i32) {
    %c0_i32 = arith.constant 0 : i32
    return %arg1, %arg2 : i32, i32
  }
  func.func @transform_2(%arg0: i32, %arg1: i32, %arg2: i32) -> (i32, i32) {
    %c0_i32 = arith.constant 0 : i32
    %c0_i32_0 = arith.constant 0 : i32
    return %c0_i32, %arg1 : i32, i32
  }
  func.func @transform_3(%arg0: i32, %arg1: i32, %arg2: i32) -> (i32, i32) {
    %c0_i32 = arith.constant 0 : i32
    %c0_i32_0 = arith.constant 0 : i32
    return %arg0, %c0_i32 : i32, i32
  }
  func.func @transform_4(%arg0: i32, %arg1: i32, %arg2: i32) -> (i32, i32) {
    %c0_i32 = arith.constant 0 : i32
    %c0_i32_0 = arith.constant 0 : i32
    return %c0_i32, %arg1 : i32, i32
  }
  func.func @transform_5(%arg0: i32, %arg1: i32, %arg2: i32) -> (i32, i32) {
    %c0_i32 = arith.constant 0 : i32
    return %arg0, %arg1 : i32, i32
  }
}

</mosaic_0001>

<llo_original>
// kernel: tpu_custom_call.1
$region0: #{tpu_custom_call.1}
  #allocation0 [shape = 'u32[]', space=smem, size = 0x4, offset = 0x4, fixed_abs, tag = 'smem constant byte address 0x4 - core index']
  #allocation1 [shape = 'u32[72,128]{1,0:T(1,128)}', space=vmem, size = 0x9000, scoped, tag = 'internal scratch']
  #allocation2 [shape = 'f32[16,128]{1,0:T(8,128)}', space=vmem, size = 0x2000, scoped, tag = 'scratch operand']
  %s0 = inlined_call_operand.hbm [shape: f32[16,128], index: 0, kind: input, shape index: {}]
  %s1 = inlined_call_operand.hbm [shape: f32[128,128], index: 1, kind: input, shape index: {}]
  %s2 = inlined_call_operand.vmem [shape: f32[1,128], index: 2, kind: input, shape index: {}]
  %s3 = inlined_call_operand.hbm [shape: f32[16,128], index: 3, kind: input, shape index: {}]
  %s4 = inlined_call_operand.hbm [shape: f32[128,128], index: 4, kind: input, shape index: {}]
  %s5 = inlined_call_operand.hbm [shape: f32[16,128], index: 5, kind: output, shape index: {}]
  %s6 = sld [smem:[#allocation0]]
  $region54: #{tpu_custom_call.1} parent=0
    _
  %s8 = ssub.s32 1, %s6
  %s9 = scalar_select 0, %s8, %s6
  $region1: #{tpu_custom_call.1} parent=0
    #allocation3 [shape = 'u8[8192]{0}', space=vmem, size = 0x2000, scoped, tag = 'input window, operand 0, single buffered']
    #allocation4 [shape = 's32[1]{0}', space=sflag, size = 0x4, scoped, tag = 'scoped memory for tpu_custom_call.1']
    #allocation5 [shape = 's32[1]{0}', space=sflag, size = 0x4, scoped, tag = 'scoped memory for tpu_custom_call.1']
    #allocation6 [shape = 'u8[65536]{0}', space=vmem, size = 0x10000, scoped, tag = 'input window, operand 1, single buffered']
    #allocation7 [shape = 's32[1]{0}', space=sflag, size = 0x4, scoped, tag = 'scoped memory for tpu_custom_call.1']
    #allocation8 [shape = 'u8[8192]{0}', space=vmem, size = 0x2000, scoped, tag = 'input window, operand 3, single buffered']
    #allocation9 [shape = 'u8[65536]{0}', space=vmem, size = 0x10000, scoped, tag = 'input window, operand 4, single buffered']
    #allocation10 [shape = 's32[1]{0}', space=sflag, size = 0x4, scoped, tag = 'scoped memory for tpu_custom_call.1']
    #allocation11 [shape = 'u8[8192]{0}', space=vmem, size = 0x2000, scoped, tag = 'output window, operand 0, single buffered']
    %10 = vsyncpa [#allocation4], 0
    %11 = vsyncpa [#allocation7], 0
    %12 = vsyncpa [#allocation10], 0
    %13 = vsyncpa [#allocation5], 0
    // Predicated region
    $region2: #{tpu_custom_call.1} parent=1 // pred_check
      _
    $region3: #{tpu_custom_call.1} parent=1 // pred_check_branch
      %15 = sbr.rel (0) target = $region5
    $region4: #{tpu_custom_call.1} parent=1 // pred_region
      %17 = vsyncadd [#allocation4], 0
      %s18 = sshll.u32 %s0, 4
      %s19 = int_to_ptr.hbm [resolvable:$true] %s18
      %s20 = sshll.u32 [#allocation3], 4
      %s21 = int_to_ptr.vmem [resolvable:$true] %s20
      %26 = dma.hbm_to_vmem [thread:$0]  %s19, 256, %s21, [#allocation4], 128, 128, 8
    $region5: #{tpu_custom_call.1} parent=1 // pred_fallthru
      _
    // Predicated region
    $region6: #{tpu_custom_call.1} parent=1 // pred_check
      _
    $region7: #{tpu_custom_call.1} parent=1 // pred_check_branch
      %28 = sbr.rel (0) target = $region9
    $region8: #{tpu_custom_call.1} parent=1 // pred_region
      %30 = vsyncadd [#allocation7], 0
      %s31 = sshll.u32 %s1, 4
      %s32 = int_to_ptr.hbm [resolvable:$true] %s31
      %s33 = sshll.u32 [#allocation6], 4
      %s34 = int_to_ptr.vmem [resolvable:$true] %s33
      %39 = dma.hbm_to_vmem [thread:$0]  %s32, 2048, %s34, [#allocation7], 128, 128, 8
    $region9: #{tpu_custom_call.1} parent=1 // pred_fallthru
      _
    // Predicated region
    $region10: #{tpu_custom_call.1} parent=1 // pred_check
      _
    $region11: #{tpu_custom_call.1} parent=1 // pred_check_branch
      %41 = sbr.rel (0) target = $region13
    $region12: #{tpu_custom_call.1} parent=1 // pred_region
      _
    $region13: #{tpu_custom_call.1} parent=1 // pred_fallthru
      _
    // Predicated region
    $region14: #{tpu_custom_call.1} parent=1 // pred_check
      _
    $region15: #{tpu_custom_call.1} parent=1 // pred_check_branch
      %43 = sbr.rel (0) target = $region17
    $region16: #{tpu_custom_call.1} parent=1 // pred_region
      %45 = vsyncadd [#allocation7], 0
      %s46 = sshll.u32 %s3, 4
      %s47 = int_to_ptr.hbm [resolvable:$true] %s46
      %s48 = sshll.u32 [#allocation8], 4
      %s49 = int_to_ptr.vmem [resolvable:$true] %s48
      %54 = dma.hbm_to_vmem [thread:$0]  %s47, 256, %s49, [#allocation7], 128, 128, 8
    $region17: #{tpu_custom_call.1} parent=1 // pred_fallthru
      _
    // Predicated region
    $region18: #{tpu_custom_call.1} parent=1 // pred_check
      _
    $region19: #{tpu_custom_call.1} parent=1 // pred_check_branch
      %56 = sbr.rel (0) target = $region21
    $region20: #{tpu_custom_call.1} parent=1 // pred_region
      %58 = vsyncadd [#allocation10], 0
      %s59 = sshll.u32 %s4, 4
      %s60 = int_to_ptr.hbm [resolvable:$true] %s59
      %s61 = sshll.u32 [#allocation9], 4
      %s62 = int_to_ptr.vmem [resolvable:$true] %s61
      %67 = dma.hbm_to_vmem [thread:$0]  %s60, 2048, %s62, [#allocation10], 128, 128, 8
    $region21: #{tpu_custom_call.1} parent=1 // pred_fallthru
      _
    // Predicated region
    $region22: #{tpu_custom_call.1} parent=1 // pred_check
      _
    $region23: #{tpu_custom_call.1} parent=1 // pred_check_branch
      %69 = sbr.rel (0) target = $region25
    $region24: #{tpu_custom_call.1} parent=1 // pred_region
      %71 = dma.done [#allocation4], 256
    $region25: #{tpu_custom_call.1} parent=1 // pred_fallthru
      _
    // Predicated region
    $region26: #{tpu_custom_call.1} parent=1 // pred_check
      _
    $region27: #{tpu_custom_call.1} parent=1 // pred_check_branch
      %73 = sbr.rel (0) target = $region29
    $region28: #{tpu_custom_call.1} parent=1 // pred_region
      %75 = dma.done [#allocation7], 2048
    $region29: #{tpu_custom_call.1} parent=1 // pred_fallthru
      _
    // Predicated region
    $region30: #{tpu_custom_call.1} parent=1 // pred_check
      _
    $region31: #{tpu_custom_call.1} parent=1 // pred_check_branch
      %77 = sbr.rel (0) target = $region33
    $region32: #{tpu_custom_call.1} parent=1 // pred_region
      %79 = dma.done [#allocation7], 256
    $region33: #{tpu_custom_call.1} parent=1 // pred_fallthru
      _
    // Predicated region
    $region34: #{tpu_custom_call.1} parent=1 // pred_check
      _
    $region35: #{tpu_custom_call.1} parent=1 // pred_check_branch
      %81 = sbr.rel (0) target = $region37
    $region36: #{tpu_custom_call.1} parent=1 // pred_region
      %83 = dma.done [#allocation10], 2048
    $region37: #{tpu_custom_call.1} parent=1 // pred_fallthru
      _
    %p84 = scmp.eq.s32.totalorder 0, 0
    // Predicated region
    $region38: #{tpu_custom_call.1} parent=1 // pred_check
      %p85 = pneg %p84
    $region39: #{tpu_custom_call.1} parent=1 // pred_check_branch
      %87 = sbr.rel (%p85) target = $region41
    $region40: #{tpu_custom_call.1} parent=1 // pred_region
      %v88 = vld [vmem:[%s2] sm:$0x1]
      %v90 = vperm.slane %v88, 0
      %92 = vst [vmem:[#allocation2] sm:$0xff] %v90
      %93 = vst [vmem:[#allocation2 + $0x8] sm:$0xff] %v90
    $region41: #{tpu_custom_call.1} parent=1 // pred_fallthru
      _
    %v94 = vld [vmem:[#allocation2] sm:$0xff]
    %v95 = vld [vmem:[#allocation2 + $0x8] sm:$0xff]
    %v96 = vld [vmem:[#allocation3] sm:$0xff]
    %v97 = vld [vmem:[#allocation3 + $0x8] sm:$0xff]
    %v98 = vld [vmem:[#allocation6] sm:$0xff]
    %v99 = vld [vmem:[#allocation6 + $0x8] sm:$0xff]
    %v100 = vld [vmem:[#allocation6 + $0x10] sm:$0xff]
    %v101 = vld [vmem:[#allocation6 + $0x18] sm:$0xff]
    %v102 = vld [vmem:[#allocation6 + $0x20] sm:$0xff]
    %v103 = vld [vmem:[#allocation6 + $0x28] sm:$0xff]
    %v104 = vld [vmem:[#allocation6 + $0x30] sm:$0xff]
    %v105 = vld [vmem:[#allocation6 + $0x38] sm:$0xff]
    %v106 = vld [vmem:[#allocation6 + $0x40] sm:$0xff]
    %v107 = vld [vmem:[#allocation6 + $0x48] sm:$0xff]
    %v108 = vld [vmem:[#allocation6 + $0x50] sm:$0xff]
    %v109 = vld [vmem:[#allocation6 + $0x58] sm:$0xff]
    %v110 = vld [vmem:[#allocation6 + $0x60] sm:$0xff]
    %v111 = vld [vmem:[#allocation6 + $0x68] sm:$0xff]
    %v112 = vld [vmem:[#allocation6 + $0x70] sm:$0xff]
    %v113 = vld [vmem:[#allocation6 + $0x78] sm:$0xff]
    %114 = vmatpush.xpose.msra.mxu0 %v113
    %115 = vmatpush.xpose.msra.mxu0 %v112
    %116 = vmatpush.xpose.msra.mxu0 %v111
    %117 = vmatpush.xpose.msra.mxu0 %v110
    %118 = vmatpush.xpose.msra.mxu0 %v109
    %119 = vmatpush.xpose.msra.mxu0 %v108
    %120 = vmatpush.xpose.msra.mxu0 %v107
    %121 = vmatpush.xpose.msra.mxu0 %v106
    %122 = vmatpush.xpose.msra.mxu0 %v105
    %123 = vmatpush.xpose.msra.mxu0 %v104
    %124 = vmatpush.xpose.msra.mxu0 %v103
    %125 = vmatpush.xpose.msra.mxu0 %v102
    %126 = vmatpush.xpose.msra.mxu0 %v101
    %127 = vmatpush.xpose.msra.mxu0 %v100
    %128 = vmatpush.xpose.msra.mxu0 %v99
    %129 = vmatpush.xpose.msra.mxu0 %v98
    %130 = vmatmul.f32.gmra.mxu0 %v96
    %v131 = vpop.f32.mrf.mxu0
    %v132 = vadd.f32 0.0, %v131
    %133 = vmatmul.f32.gmra.mxu0 %v97
    %v134 = vpop.f32.mrf.mxu0
    %v135 = vadd.f32 0.0, %v134
    %136 = vdwg.mxu0
    %v137 = vadd.f32 %v94, %v132
    %v138 = vadd.f32 %v95, %v135
    %139 = vst [vmem:[#allocation2] sm:$0xff] %v137
    %140 = vst [vmem:[#allocation2 + $0x8] sm:$0xff] %v138
    // Predicated region
    $region42: #{tpu_custom_call.1} parent=1 // pred_check
      %p141 = pneg %p84
    $region43: #{tpu_custom_call.1} parent=1 // pred_check_branch
      %143 = sbr.rel (%p141) target = $region45
    $region44: #{tpu_custom_call.1} parent=1 // pred_region
      %v144 = vld [vmem:[#allocation8] sm:$0xff]
      %v145 = vld [vmem:[#allocation8 + $0x8] sm:$0xff]
      %v146 = vld [vmem:[#allocation9] sm:$0xff]
      %v147 = vld [vmem:[#allocation9 + $0x8] sm:$0xff]
      %v148 = vld [vmem:[#allocation9 + $0x10] sm:$0xff]
      %v149 = vld [vmem:[#allocation9 + $0x18] sm:$0xff]
      %v150 = vld [vmem:[#allocation9 + $0x20] sm:$0xff]
      %v151 = vld [vmem:[#allocation9 + $0x28] sm:$0xff]
      %v152 = vld [vmem:[#allocation9 + $0x30] sm:$0xff]
      %v153 = vld [vmem:[#allocation9 + $0x38] sm:$0xff]
      %v154 = vld [vmem:[#allocation9 + $0x40] sm:$0xff]
      %v155 = vld [vmem:[#allocation9 + $0x48] sm:$0xff]
      %v156 = vld [vmem:[#allocation9 + $0x50] sm:$0xff]
      %v157 = vld [vmem:[#allocation9 + $0x58] sm:$0xff]
      %v158 = vld [vmem:[#allocation9 + $0x60] sm:$0xff]
      %v159 = vld [vmem:[#allocation9 + $0x68] sm:$0xff]
      %v160 = vld [vmem:[#allocation9 + $0x70] sm:$0xff]
      %v161 = vld [vmem:[#allocation9 + $0x78] sm:$0xff]
      %162 = vmatpush.msra.mxu0 %v161
      %163 = vmatpush.msra.mxu0 %v160
      %164 = vmatpush.msra.mxu0 %v159
      %165 = vmatpush.msra.mxu0 %v158
      %166 = vmatpush.msra.mxu0 %v157
      %167 = vmatpush.msra.mxu0 %v156
      %168 = vmatpush.msra.mxu0 %v155
      %169 = vmatpush.msra.mxu0 %v154
      %170 = vmatpush.msra.mxu0 %v153
      %171 = vmatpush.msra.mxu0 %v152
      %172 = vmatpush.msra.mxu0 %v151
      %173 = vmatpush.msra.mxu0 %v150
      %174 = vmatpush.msra.mxu0 %v149
      %175 = vmatpush.msra.mxu0 %v148
      %176 = vmatpush.msra.mxu0 %v147
      %177 = vmatpush.msra.mxu0 %v146
      %178 = vmatmul.f32.gmra.mxu0 %v144
      %v179 = vpop.f32.mrf.mxu0
      %v180 = vadd.f32 0.0, %v179
      %181 = vmatmul.f32.gmra.mxu0 %v145
      %v182 = vpop.f32.mrf.mxu0
      %v183 = vadd.f32 0.0, %v182
      %184 = vdwg.mxu0
      %v185 = vld [vmem:[#allocation2] sm:$0xff]
      %v186 = vld [vmem:[#allocation2 + $0x8] sm:$0xff]
      %v187 = vadd.f32 %v185, %v180
      %v188 = vadd.f32 %v186, %v183
      %189 = vst [vmem:[#allocation11] sm:$0xff] %v187
      %190 = vst [vmem:[#allocation11 + $0x8] sm:$0xff] %v188
    $region45: #{tpu_custom_call.1} parent=1 // pred_fallthru
      _
    // Predicated region
    $region46: #{tpu_custom_call.1} parent=1 // pred_check
      _
    $region47: #{tpu_custom_call.1} parent=1 // pred_check_branch
      %192 = sbr.rel (0) target = $region49
    $region48: #{tpu_custom_call.1} parent=1 // pred_region
      %194 = vsyncadd [#allocation5], 0
      %s195 = sshll.u32 [#allocation11], 4
      %s196 = int_to_ptr.vmem [resolvable:$true] %s195
      %s197 = sshll.u32 %s5, 4
      %s198 = int_to_ptr.hbm [resolvable:$true] %s197
      %203 = dma.vmem_to_hbm [thread:$0]  %s196, 256, %s198, [#allocation5], 128, 128, 8
    $region49: #{tpu_custom_call.1} parent=1 // pred_fallthru
      _
    // Predicated region
    $region50: #{tpu_custom_call.1} parent=1 // pred_check
      _
    $region51: #{tpu_custom_call.1} parent=1 // pred_check_branch
      %205 = sbr.rel (0) target = $region53
    $region52: #{tpu_custom_call.1} parent=1 // pred_region
      %207 = dma.done [#allocation5], 256
    $region53: #{tpu_custom_call.1} parent=1 // pred_fallthru
      _
    %208 = vsyncpa [#allocation4], 1
    %209 = vsyncpa [#allocation7], 1
    %210 = vsyncpa [#allocation10], 1
    %211 = vsyncpa [#allocation5], 1

</llo_original>
